<compile_context>
chip_gen: v5e
topology: v5e:2x2
jax: 0.10.0
libtpu: 0.0.40
codegen_flags: <defaults>
</compile_context>

<pallas_src>
import functools

import jax
import jax.numpy as jnp
from jax.experimental import pallas as pl
from jax.experimental.pallas import tpu as pltpu


def _round_up(x, m):
    return ((x + m - 1) // m) * m


def _choose_tile_s(hw_pad, n_classes, itemsize, n_batch, vmem_budget_bytes):
    """Largest 128-multiple spatial tile fitting the VMEM budget, keeping >=4 steps."""
    # Estimated VMEM bytes per spatial column:
    #   double-buffered logits (C*itemsize) + int32 targets (4)        streams
    #   + ~5 live (C, TILE_S) f32 intermediates + a few (1, TILE_S) rows.
    per_col = 2 * (n_classes * itemsize + 4) + 5 * n_classes * 4 + 32
    tile = (vmem_budget_bytes // per_col) // 128 * 128
    tile = max(128, min(tile, hw_pad))

    # Keep a handful of "parallel" grid steps alive (megacore on v7x, pipeline
    # overlap everywhere) when the problem is big enough to allow it.
    min_steps = 4
    s_steps = -(-hw_pad // tile)
    if n_batch * s_steps < min_steps and tile > 128:
        want_s = min(-(-min_steps // n_batch), hw_pad // 128)
        tile = max(128, _round_up(-(-hw_pad // want_s), 128))
    return tile


def _focal_loss_kernel(x_ref, t_ref, a_ref, out_ref, *,
                       gamma, hw, tile_s, exp_bf16):
    """One (C, TILE_S) tile: classes on sublanes, spatial columns on lanes."""
    x = x_ref[...].astype(jnp.float32)      # (C, TS) logits (native dtype on wire)
    t = t_ref[...]                          # (1, TS) int32 targets
    a = a_ref[...]                          # (C, 1)  f32 per-class alpha

    # Validity mask for ragged last tile / lane padding (static true extent hw).
    s = pl.program_id(1)
    lane = jax.lax.broadcasted_iota(jnp.int32, t.shape, 1)       # (1, TS)
    valid = (s * tile_s + lane) < hw                             # (1, TS)

    # Numerically stable log-softmax over the class (sublane) axis.
    m = jnp.max(x, axis=0, keepdims=True)                        # (1, TS)
    z = x - m                                                    # (C, TS)
    if exp_bf16:
        # Opt-in EUP relief for v6e/v7x: z <= 0 so exp in [0, 1]; sum/log in f32.
        ez = jnp.exp(z.astype(jnp.bfloat16)).astype(jnp.float32)
    else:
        ez = jnp.exp(z)
    lse = jnp.log(jnp.sum(ez, axis=0, keepdims=True))            # (1, TS)

    # Fused one-hot "gathers" of z[target] and alpha[target] (no f32 one-hot).
    cls = jax.lax.broadcasted_iota(jnp.int32, x.shape, 0)        # (C, TS)
    hit = cls == t                                               # (C, TS) bool
    zt = jnp.sum(jnp.where(hit, z, 0.0), axis=0, keepdims=True)  # (1, TS)
    at = jnp.sum(jnp.where(hit, a, 0.0), axis=0, keepdims=True)  # (1, TS)

    logpt = zt - lse                                             # (1, TS)
    pt = jnp.exp(logpt)

    # (1 - pt)**gamma, specialized at trace time for small integer gamma.
    g = float(gamma)
    one_m_pt = 1.0 - pt
    if g == 0.0:
        mod = jnp.ones_like(pt)
    elif g == float(int(g)) and 0 < int(g) <= 4:
        mod = one_m_pt
        for _ in range(int(g) - 1):
            mod = mod * one_m_pt
    else:
        mod = one_m_pt ** g

    loss = jnp.where(valid, -(mod * (at * logpt)), 0.0)          # (1, TS)

    # Per-tile scalar partial; final reduction happens in the wrapper so the
    # whole grid stays fully "parallel".
    out_ref[...] = jnp.sum(loss, keepdims=True)


def focal_loss(logits_nchw, target_nhw, *, gamma=0.0, alpha=None,
               size_average=True, vmem_budget_bytes=20 * 1024 * 1024,
               fast_exp=False):
    """Focal loss matching PyTorch FocalLoss.forward semantics.

    logits_nchw: (N, C, H, W) float logits (f32 or bf16, streamed natively)
    target_nhw : (N, H, W)    int class indices
    alpha      : None | float | list of per-class weights
    """
    N, C, H, W = logits_nchw.shape
    HW = H * W

    # Alpha setup (mirrors FocalLoss.__init__); None -> weights of 1.
    if alpha is None:
        alpha_vec = jnp.ones((C,), jnp.float32)
    elif isinstance(alpha, (float, int)):
        assert C == 2, "scalar alpha implies binary classification (C == 2)"
        alpha_vec = jnp.array([float(alpha), 1.0 - float(alpha)], jnp.float32)
    else:
        alpha_vec = jnp.asarray(alpha, jnp.float32)
    alpha_col = alpha_vec.reshape(C, 1)

    # (N, C, H, W) -> (N, C, HW): contiguous reshape, no HBM transpose, no upcast.
    x = logits_nchw.reshape(N, C, HW)
    t = target_nhw.reshape(N, 1, HW).astype(jnp.int32)

    # Only pad to the 128-lane boundary (rare; typical H*W is already aligned).
    # Ragged / padded columns are masked in-kernel against the true HW.
    hw_pad = _round_up(HW, 128)
    if hw_pad != HW:
        pad = hw_pad - HW
        x = jnp.pad(x, ((0, 0), (0, 0), (0, pad)))
        t = jnp.pad(t, ((0, 0), (0, 0), (0, pad)))

    itemsize = jnp.dtype(x.dtype).itemsize
    tile_s = _choose_tile_s(hw_pad, C, itemsize, N, vmem_budget_bytes)
    s_grid = pl.cdiv(hw_pad, tile_s)

    kernel = functools.partial(_focal_loss_kernel, gamma=float(gamma),
                               hw=HW, tile_s=tile_s, exp_bf16=bool(fast_exp))

    partials = pl.pallas_call(
        kernel,
        out_shape=jax.ShapeDtypeStruct((N, s_grid, 1, 1), jnp.float32),
        grid_spec=pltpu.PrefetchScalarGridSpec(
            num_scalar_prefetch=0,
            grid=(N, s_grid),
            in_specs=[
                # logits: (C, TILE_S) block, classes on sublanes, cols on lanes
                pl.BlockSpec((pl.Squeezed(), C, tile_s), lambda n, s: (n, 0, s)),
                # targets: lane-dense (1, TILE_S) int32
                pl.BlockSpec((pl.Squeezed(), 1, tile_s), lambda n, s: (n, 0, s)),
                # per-class alpha: tiny (C, 1), same block every step
                pl.BlockSpec((C, 1), lambda n, s: (0, 0)),
            ],
            out_specs=pl.BlockSpec(
                (pl.Squeezed(), pl.Squeezed(), 1, 1),
                lambda n, s: (n, s, 0, 0)),
        ),
        compiler_params=pltpu.CompilerParams(
            dimension_semantics=("parallel", "parallel"),
            # Raise v5e's 16 MiB default scoped VMEM; matches v6e/v7x defaults
            # and stays well under v7x's 64 MiB physical VMEM.
            vmem_limit_bytes=32 * 1024 * 1024),
    )(x, t, alpha_col)

    total = jnp.sum(partials)
    return total / (N * HW) if size_average else total


def _focal_loss_ref(logits_nchw, target_nhw, *, gamma, alpha, size_average):
    """Pure-JAX reference for verification."""
    N, C, H, W = logits_nchw.shape
    x = jnp.transpose(logits_nchw, (0, 2, 3, 1)).reshape(-1, C).astype(jnp.float32)
    t = target_nhw.reshape(-1).astype(jnp.int32)
    logp = jax.nn.log_softmax(x, axis=1)
    logpt = jnp.take_along_axis(logp, t[:, None], axis=1)[:, 0]
    pt = jnp.exp(logpt)
    if alpha is not None:
        if isinstance(alpha, (float, int)):
            a = jnp.array([alpha, 1.0 - alpha], jnp.float32)
        else:
            a = jnp.asarray(alpha, jnp.float32)
        logpt = logpt * a[t]
    loss = -1.0 * (1.0 - pt) ** gamma * logpt
    return loss.mean() if size_average else loss.sum()


if __name__ == "__main__":
    key = jax.random.PRNGKey(0)
    k1, k2, k3, k4 = jax.random.split(key, 4)

    # Config 1: integer gamma fast path, per-class alpha, HW multiple of 128.
    N, C, H, W = 2, 4, 16, 16
    gamma, alpha = 2.0, [0.1, 0.2, 0.3, 0.4]
    logits = jax.random.normal(k1, (N, C, H, W), jnp.float32)
    target = jax.random.randint(k2, (N, H, W), 0, C, jnp.int32)

    out = focal_loss(logits, target, gamma=gamma, alpha=alpha, size_average=True)
    out = jax.block_until_ready(out)
    ref = _focal_loss_ref(logits, target, gamma=gamma, alpha=alpha, size_average=True)
    assert jnp.allclose(out, ref, atol=1e-5, rtol=1e-5), (out, ref)

    # Config 2: fractional gamma, alpha=None, HW not a multiple of 128
    # (exercises the 128-pad + in-kernel validity mask), sum reduction.
    N2, C2, H2, W2 = 2, 3, 10, 10
    logits2 = jax.random.normal(k3, (N2, C2, H2, W2), jnp.float32)
    target2 = jax.random.randint(k4, (N2, H2, W2), 0, C2, jnp.int32)

    out2 = focal_loss(logits2, target2, gamma=1.5, alpha=None, size_average=False)
    out2 = jax.block_until_ready(out2)
    ref2 = _focal_loss_ref(logits2, target2, gamma=1.5, alpha=None, size_average=False)
    assert jnp.allclose(out2, ref2, atol=1e-4, rtol=1e-4), (out2, ref2)

    print("KERNEL_OK")
</pallas_src>

<mosaic_0001>
module attributes {stable_mosaic.version = 11 : i64} {
  func.func @_focal_loss_kernel(%arg0: i32, %arg1: i32, %arg2: memref<1x4x128xf32, #tpu.memory_space<vmem>>, %arg3: memref<1x1x128xi32, #tpu.memory_space<vmem>>, %arg4: memref<4x1xf32, #tpu.memory_space<vmem>>, %arg5: memref<1x1x1x1xf32, #tpu.memory_space<vmem>>) attributes {dimension_semantics = [#tpu.dimension_semantics<parallel>, #tpu.dimension_semantics<parallel>], iteration_bounds = array<i64: 2, 2>, scalar_prefetch = 0 : i64, scratch_operands = 0 : i64, tpu.core_type = #tpu.core_type<tc>, window_params = [{transform_indices = @transform_0, window_bounds = array<i64: 1, 4, 128>}, {transform_indices = @transform_1, window_bounds = array<i64: 1, 1, 128>}, {pipeline_mode = #tpu.pipeline_mode<synchronous>, transform_indices = @transform_2, window_bounds = array<i64: 4, 1>}, {transform_indices = @transform_3, window_bounds = array<i64: 1, 1, 1, 1>}]} {
    %c0 = arith.constant 0 : index
    %c0_0 = arith.constant 0 : index
    %c0_1 = arith.constant 0 : index
    %0 = vector.load %arg2[%c0, %c0_0, %c0_1] : memref<1x4x128xf32, #tpu.memory_space<vmem>>, vector<1x4x128xf32>
    %1 = vector.shape_cast %0 : vector<1x4x128xf32> to vector<4x128xf32>
    %c0_2 = arith.constant 0 : index
    %c0_3 = arith.constant 0 : index
    %c0_4 = arith.constant 0 : index
    %2 = vector.load %arg3[%c0_2, %c0_3, %c0_4] : memref<1x1x128xi32, #tpu.memory_space<vmem>>, vector<1x1x128xi32>
    %3 = vector.shape_cast %2 : vector<1x1x128xi32> to vector<1x128xi32>
    %c0_5 = arith.constant 0 : index
    %c0_6 = arith.constant 0 : index
    %4 = vector.load %arg4[%c0_5, %c0_6] : memref<4x1xf32, #tpu.memory_space<vmem>>, vector<4x1xf32>
    %5 = tpu.iota {dimensions = array<i32: 1>} : vector<1x128xi32>
    %c128_i32 = arith.constant 128 : i32
    %6 = arith.muli %arg1, %c128_i32 : i32
    %7 = vector.broadcast %6 : i32 to vector<1x128xi32>
    %8 = arith.addi %7, %5 : vector<1x128xi32>
    %c256_i32 = arith.constant 256 : i32
    %9 = vector.broadcast %c256_i32 : i32 to vector<1x128xi32>
    %10 = arith.cmpi slt, %8, %9 : vector<1x128xi32>
    %cst = arith.constant dense<0xFF800000> : vector<128xf32>
    %11 = vector.multi_reduction <maximumf>, %1, %cst [0] : vector<4x128xf32> to vector<128xf32>
    %12 = vector.shape_cast %11 : vector<128xf32> to vector<1x128xf32>
    %13 = vector.broadcast %12 : vector<1x128xf32> to vector<4x128xf32>
    %14 = arith.subf %1, %13 : vector<4x128xf32>
    %15 = math.exp %14 : vector<4x128xf32>
    %cst_7 = arith.constant dense<0.000000e+00> : vector<128xf32>
    %16 = vector.multi_reduction <add>, %15, %cst_7 [0] : vector<4x128xf32> to vector<128xf32>
    %17 = vector.shape_cast %16 : vector<128xf32> to vector<1x128xf32>
    %18 = math.log %17 : vector<1x128xf32>
    %19 = tpu.iota {dimensions = array<i32: 0>} : vector<4x128xi32>
    %20 = vector.broadcast %3 : vector<1x128xi32> to vector<4x128xi32>
    %21 = arith.cmpi eq, %19, %20 : vector<4x128xi32>
    %cst_8 = arith.constant 0.000000e+00 : f32
    %22 = vector.broadcast %cst_8 : f32 to vector<4x128xf32>
    %23 = arith.select %21, %14, %22 : vector<4x128xi1>, vector<4x128xf32>
    %cst_9 = arith.constant dense<0.000000e+00> : vector<128xf32>
    %24 = vector.multi_reduction <add>, %23, %cst_9 [0] : vector<4x128xf32> to vector<128xf32>
    %25 = vector.shape_cast %24 : vector<128xf32> to vector<1x128xf32>
    %cst_10 = arith.constant 0.000000e+00 : f32
    %26 = vector.shape_cast %4 : vector<4x1xf32> to vector<4x1xf32>
    %27 = vector.broadcast %26 : vector<4x1xf32> to vector<4x128xf32>
    %28 = vector.broadcast %cst_10 : f32 to vector<4x128xf32>
    %29 = arith.select %21, %27, %28 : vector<4x128xi1>, vector<4x128xf32>
    %cst_11 = arith.constant dense<0.000000e+00> : vector<128xf32>
    %30 = vector.multi_reduction <add>, %29, %cst_11 [0] : vector<4x128xf32> to vector<128xf32>
    %31 = vector.shape_cast %30 : vector<128xf32> to vector<1x128xf32>
    %32 = arith.subf %25, %18 : vector<1x128xf32>
    %33 = math.exp %32 : vector<1x128xf32>
    %cst_12 = arith.constant 1.000000e+00 : f32
    %34 = vector.broadcast %cst_12 : f32 to vector<1x128xf32>
    %35 = arith.subf %34, %33 : vector<1x128xf32>
    %36 = arith.mulf %35, %35 : vector<1x128xf32>
    %37 = arith.mulf %31, %32 : vector<1x128xf32>
    %38 = arith.mulf %36, %37 : vector<1x128xf32>
    %cst_13 = arith.constant 0.000000e+00 : f32
    %39 = vector.broadcast %cst_13 : f32 to vector<1x128xf32>
    %40 = arith.subf %39, %38 : vector<1x128xf32>
    %cst_14 = arith.constant 0.000000e+00 : f32
    %41 = vector.broadcast %cst_14 : f32 to vector<1x128xf32>
    %42 = arith.select %10, %40, %41 : vector<1x128xi1>, vector<1x128xf32>
    %43 = vector.shape_cast %42 : vector<1x128xf32> to vector<1x1x128xf32>
    %cst_15 = arith.constant dense<0.000000e+00> : vector<1xf32>
    %44 = vector.multi_reduction <add>, %43, %cst_15 [1, 2] : vector<1x1x128xf32> to vector<1xf32>
    %45 = vector.shape_cast %44 : vector<1xf32> to vector<1x1x1xf32>
    %46 = vector.extract %45[0, 0, 0] : f32 from vector<1x1x1xf32>
    %47 = vector.broadcast %46 : f32 to vector<1x1xf32>
    %c0_16 = arith.constant 0 : index
    %c0_17 = arith.constant 0 : index
    %c0_18 = arith.constant 0 : index
    %c0_19 = arith.constant 0 : index
    %48 = vector.load %arg5[%c0_16, %c0_17, %c0_18, %c0_19] : memref<1x1x1x1xf32, #tpu.memory_space<vmem>>, vector<1x1x1x1xf32>
    %49 = vector.shape_cast %48 : vector<1x1x1x1xf32> to vector<1x1xf32>
    %50 = vector.shape_cast %47 : vector<1x1xf32> to vector<1x1x1x1xf32>
    tpu.vector_store %arg5[%c0_16, %c0_17, %c0_18, %c0_19], %50 {strides = array<i32>} : memref<1x1x1x1xf32, #tpu.memory_space<vmem>>, vector<1x1x1x1xf32>,
    return
  }
  func.func @transform_0(%arg0: i32, %arg1: i32) -> (i32, i32, i32) {
    %c0_i32 = arith.constant 0 : i32
    %c0_i32_0 = arith.constant 0 : i32
    return %arg0, %c0_i32, %arg1 : i32, i32, i32
  }
  func.func @transform_1(%arg0: i32, %arg1: i32) -> (i32, i32, i32) {
    %c0_i32 = arith.constant 0 : i32
    %c0_i32_0 = arith.constant 0 : i32
    return %arg0, %c0_i32, %arg1 : i32, i32, i32
  }
  func.func @transform_2(%arg0: i32, %arg1: i32) -> (i32, i32) {
    %c0_i32 = arith.constant 0 : i32
    %c0_i32_0 = arith.constant 0 : i32
    %c0_i32_1 = arith.constant 0 : i32
    return %c0_i32, %c0_i32_0 : i32, i32
  }
  func.func @transform_3(%arg0: i32, %arg1: i32) -> (i32, i32, i32, i32) {
    %c0_i32 = arith.constant 0 : i32
    %c0_i32_0 = arith.constant 0 : i32
    %c0_i32_1 = arith.constant 0 : i32
    return %arg0, %arg1, %c0_i32, %c0_i32_0 : i32, i32, i32, i32
  }
}

</mosaic_0001>

<llo_original>
// kernel: tpu_custom_call.1
$region0: #{tpu_custom_call.1}
  #allocation0 [shape = 'u32[]', space=smem, size = 0x4, offset = 0x4, fixed_abs, tag = 'smem constant byte address 0x4 - core index']
  #allocation1 [shape = 'u32[72,128]{1,0:T(1,128)}', space=vmem, size = 0x9000, scoped, tag = 'internal scratch']
  %s0 = inlined_call_operand.hbm [shape: f32[2,4,256], index: 0, kind: input, shape index: {}]
  %s1 = inlined_call_operand.vmem [shape: s32[2,1,256], index: 1, kind: input, shape index: {}]
  %s2 = inlined_call_operand.vmem [shape: f32[4,1], index: 2, kind: input, shape index: {}]
  %s3 = inlined_call_operand.vmem [shape: f32[2,2,1,1], index: 3, kind: output, shape index: {}]
  %s4 = sld [smem:[#allocation0]]
  $region49: #{tpu_custom_call.1} parent=0
    _
  %s6 = ssub.s32 1, %s4
  %s7 = scalar_select 0, %s6, %s4
  $region1: #{tpu_custom_call.1} parent=0
    #allocation2 [shape = 'u8[4096]{0}', space=vmem, size = 0x1000, scoped, tag = 'input window, operand 0']
    #allocation3 [shape = 's32[2]{0}', space=sflag, size = 0x8, scoped, tag = 'scoped memory for tpu_custom_call.1']
    %8 = vsyncpa [#allocation3], 0
    %s9 = scalar_lea.sflag [#allocation3], 1
    %10 = vsyncpa %s9, 0
    loop: start=0, step=1, limit=6
    $region2: #{tpu_custom_call.1} parent=1 // loop_pre_header
      _
    $region3: #{tpu_custom_call.1} parent=1 // loop_header
      %s12 = sphi 0, %s16
      %p13 = scmp.ge.s32.totalorder %s12, 6
      %s19 = sphi 0, %s31
      %s20 = sphi 0, %s27
      %s21 = sphi 0, %s19
      %s22 = sphi 0, %s20
      %s23 = sphi 0, %s21
      %s24 = sphi 0, %s22
      %s36 = sphi 0, %s38
      %s39 = sphi 0, %s36
      %s40 = sphi 0, %s39
      %s56 = sphi 0, %s40
      %s64 = sphi 0, %s66
      %s67 = sphi 0, %s64
      %s68 = sphi 0, %s67
      %s84 = sphi 0, %s68
      %s88 = sphi 0, %s88
      %s90 = sphi 0, %s88
      %s91 = sphi 0, %s90
      %s105 = sphi 0, %s91
      %s113 = sphi 0, %s115
      %s116 = sphi 0, %s113
      %s117 = sphi 0, %s116
      %s133 = sphi 0, %s117
    $region4: #{tpu_custom_call.1} parent=1 // loop_header_branch
      %15 = sbr.rel (%p13) target = $region8
    $region5: #{tpu_custom_call.1} parent=1 // loop_body
      %s17 = ssub.s32 %s12, 1
      %s18 = ssub.s32 %s12, 2
      %s25 = sadd.s32 1, %s20
      %p26 = scmp.ge.s32.totalorder %s25, 2
      %s27 = scalar_select %p26, 0, %s25
      %s28 = sadd.s32 1, %s19
      %s29 = scalar_select %p26, %s28, %s19
      %p30 = scmp.ge.s32.totalorder %s29, 2
      %s31 = scalar_select %p30, 0, %s29
      %s32 = ssub.s32 %s19, %s31
      %s33 = ssub.s32 %s20, %s27
      %s34 = sor.u32 %s32, %s33
      %p35 = scmp.eq.s32.totalorder %s34, 0
      %s37 = sadd.s32 %s36, 1
      %s38 = scalar_select %p35, %s36, %s37
      %p41 = pneg %p35
      %p42 = scmp.eq.s32.totalorder %s12, 3
      %p43 = por %p41, %p42
      %p44 = scmp.ne.s32.totalorder %s36, %s39
      %p45 = scmp.eq.s32.totalorder %s12, 0
      %p46 = por %p44, %p45
      %p47 = scmp.ne.s32.totalorder %s36, %s39
      %p48 = scmp.eq.s32.totalorder %s17, 3
      %p49 = por %p47, %p48
      %p50 = scmp.ne.s32.totalorder %s39, %s40
      %p51 = scmp.eq.s32.totalorder %s17, 0
      %p52 = por %p50, %p51
      %p53 = scmp.ne.s32.totalorder %s39, %s40
      %p54 = scmp.eq.s32.totalorder %s18, 3
      %p55 = por %p53, %p54
      %p57 = scmp.ne.s32.totalorder %s40, %s56
      %p58 = scmp.eq.s32.totalorder %s18, 0
      %p59 = por %p57, %p58
      %s60 = ssub.s32 %s19, %s31
      %s61 = ssub.s32 %s20, %s27
      %s62 = sor.u32 %s60, %s61
      %p63 = scmp.eq.s32.totalorder %s62, 0
      %s65 = sadd.s32 %s64, 1
      %s66 = scalar_select %p63, %s64, %s65
      %p69 = pneg %p63
      %p70 = scmp.eq.s32.totalorder %s12, 3
      %p71 = por %p69, %p70
      %p72 = scmp.ne.s32.totalorder %s64, %s67
      %p73 = scmp.eq.s32.totalorder %s12, 0
      %p74 = por %p72, %p73
      %p75 = scmp.ne.s32.totalorder %s64, %s67
      %p76 = scmp.eq.s32.totalorder %s17, 3
      %p77 = por %p75, %p76
      %p78 = scmp.ne.s32.totalorder %s67, %s68
      %p79 = scmp.eq.s32.totalorder %s17, 0
      %p80 = por %p78, %p79
      %p81 = scmp.ne.s32.totalorder %s67, %s68
      %p82 = scmp.eq.s32.totalorder %s18, 3
      %p83 = por %p81, %p82
      %p85 = scmp.ne.s32.totalorder %s68, %s84
      %p86 = scmp.eq.s32.totalorder %s18, 0
      %p87 = por %p85, %p86
      %s89 = sadd.s32 %s88, 1
      %p92 = scmp.eq.s32.totalorder %s12, 3
      %p93 = scmp.ne.s32.totalorder %s88, %s90
      %p94 = scmp.eq.s32.totalorder %s12, 0
      %p95 = por %p93, %p94
      %p96 = scmp.ne.s32.totalorder %s88, %s90
      %p97 = scmp.eq.s32.totalorder %s17, 3
      %p98 = por %p96, %p97
      %p99 = scmp.ne.s32.totalorder %s90, %s91
      %p100 = scmp.eq.s32.totalorder %s17, 0
      %p101 = por %p99, %p100
      %p102 = scmp.ne.s32.totalorder %s90, %s91
      %p103 = scmp.eq.s32.totalorder %s18, 3
      %p104 = por %p102, %p103
      %p106 = scmp.ne.s32.totalorder %s91, %s105
      %p107 = scmp.eq.s32.totalorder %s18, 0
      %p108 = por %p106, %p107
      %s109 = ssub.s32 %s19, %s31
      %s110 = ssub.s32 %s20, %s27
      %s111 = sor.u32 %s109, %s110
      %p112 = scmp.eq.s32.totalorder %s111, 0
      %s114 = sadd.s32 %s113, 1
      %s115 = scalar_select %p112, %s113, %s114
      %p118 = pneg %p112
      %p119 = scmp.eq.s32.totalorder %s12, 3
      %p120 = por %p118, %p119
      %p121 = scmp.ne.s32.totalorder %s113, %s116
      %p122 = scmp.eq.s32.totalorder %s12, 0
      %p123 = por %p121, %p122
      %p124 = scmp.ne.s32.totalorder %s113, %s116
      %p125 = scmp.eq.s32.totalorder %s17, 3
      %p126 = por %p124, %p125
      %p127 = scmp.ne.s32.totalorder %s116, %s117
      %p128 = scmp.eq.s32.totalorder %s17, 0
      %p129 = por %p127, %p128
      %p130 = scmp.ne.s32.totalorder %s116, %s117
      %p131 = scmp.eq.s32.totalorder %s18, 3
      %p132 = por %p130, %p131
      %p134 = scmp.ne.s32.totalorder %s117, %s133
      %p135 = scmp.eq.s32.totalorder %s18, 0
      %p136 = por %p134, %p135
      %p137 = scmp.le.s32.totalorder 1, %s12
      %p138 = scmp.lt.s32.totalorder %s12, 5
      %p139 = pnand %p137, %p138
      %p140 = pneg %p139
      // Predicated region
      $region9: #{tpu_custom_call.1} parent=5 // pred_check
        _
      $region10: #{tpu_custom_call.1} parent=5 // pred_check_branch
        %142 = sbr.rel (%p139) target = $region12
      $region11: #{tpu_custom_call.1} parent=5 // pred_region
        %s143 = ssub.s32 %s12, 1
        // Predicated region
        $region13: #{tpu_custom_call.1} parent=11 // pred_check
          %p144 = pneg %p101
        $region14: #{tpu_custom_call.1} parent=11 // pred_check_branch
          %146 = sbr.rel (%p144) target = $region16
        $region15: #{tpu_custom_call.1} parent=11 // pred_region
          _
        $region16: #{tpu_custom_call.1} parent=11 // pred_fallthru
          _
      $region12: #{tpu_custom_call.1} parent=5 // pred_fallthru
        _
      %p147 = scmp.lt.s32.totalorder %s12, 4
      // Predicated region
      $region17: #{tpu_custom_call.1} parent=5 // pred_check
        %p148 = pneg %p147
      $region18: #{tpu_custom_call.1} parent=5 // pred_check_branch
        %150 = sbr.rel (%p148) target = $region20
      $region19: #{tpu_custom_call.1} parent=5 // pred_region
        // Predicated region
        $region21: #{tpu_custom_call.1} parent=19 // pred_check
          %p151 = pneg %p46
        $region22: #{tpu_custom_call.1} parent=19 // pred_check_branch
          %153 = sbr.rel (%p151) target = $region24
        $region23: #{tpu_custom_call.1} parent=19 // pred_region
          %s154 = sand.u32 %s36, 1
          %s155 = scalar_lea.sflag [#allocation3], %s154
          %s156 = sand.u32 %s36, 1
          %s157 = smul.addr %s156, 4
          %s158 = scalar_lea.vmem [#allocation2], %s157
          %160 = vsyncadd %s155, 0
          %s161 = smul.addr %s19, 2
          %s162 = sadd.s32 %s20, %s161
          %s163 = smul.addr %s162, 4
          %s164 = scalar_lea.hbm %s0, %s163
          %s166 = sshll.u32 %s164, 4
          %s167 = int_to_ptr.hbm [resolvable:$true] %s166
          %s168 = sshll.u32 %s158, 4
          %s169 = int_to_ptr.vmem [resolvable:$true] %s168
          %171 = dma.hbm_to_vmem [thread:$0]  %s167, 64, %s169, %s155
        $region24: #{tpu_custom_call.1} parent=19 // pred_fallthru
          _
        // Predicated region
        $region25: #{tpu_custom_call.1} parent=19 // pred_check
          %p172 = pneg %p74
        $region26: #{tpu_custom_call.1} parent=19 // pred_check_branch
          %174 = sbr.rel (%p172) target = $region28
        $region27: #{tpu_custom_call.1} parent=19 // pred_region
          %p175 = scmp.lt.s32.totalorder %s19, 1
          %s176 = scalar_select %p175, %s19, 1
          %p177 = scmp.lt.s32.totalorder %s20, 1
          %s178 = scalar_select %p177, %s20, 1
          %s179 = smul.addr %s176, 2
          %s180 = sadd.s32 %s178, %s179
          %s181 = scalar_lea.vmem %s1, %s180
        $region28: #{tpu_custom_call.1} parent=19 // pred_fallthru
          _
      $region20: #{tpu_custom_call.1} parent=5 // pred_fallthru
        _
      %p182 = scmp.le.s32.totalorder 1, %s12
      %p183 = scmp.lt.s32.totalorder %s12, 5
      %p184 = pnand %p182, %p183
      %p185 = pneg %p184
      // Predicated region
      $region29: #{tpu_custom_call.1} parent=5 // pred_check
        _
      $region30: #{tpu_custom_call.1} parent=5 // pred_check_branch
        %187 = sbr.rel (%p184) target = $region32
      $region31: #{tpu_custom_call.1} parent=5 // pred_region
        %s188 = ssub.s32 %s12, 1
        %s189 = sand.u32 %s39, 1
        %s190 = scalar_lea.sflag [#allocation3], %s189
        %s191 = sand.u32 %s39, 1
        %s192 = smul.addr %s191, 4
        %s193 = scalar_lea.vmem [#allocation2], %s192
        // Predicated region
        $region33: #{tpu_custom_call.1} parent=31 // pred_check
          %p194 = pneg %p52
        $region34: #{tpu_custom_call.1} parent=31 // pred_check_branch
          %196 = sbr.rel (%p194) target = $region36
        $region35: #{tpu_custom_call.1} parent=31 // pred_region
          %198 = dma.done %s190, 64
        $region36: #{tpu_custom_call.1} parent=31 // pred_fallthru
          _
        %s199 = sand.u32 %s39, 1
        %s200 = scalar_lea.sflag [#allocation3], %s199
        %s201 = sand.u32 %s39, 1
        %s202 = smul.addr %s201, 4
        %s203 = scalar_lea.vmem [#allocation2], %s202
        %p204 = pneg %p52
        %p205 = pneg %p49
        %p206 = scmp.lt.s32.totalorder %s21, 1
        %s207 = scalar_select %p206, %s21, 1
        %p208 = scmp.lt.s32.totalorder %s22, 1
        %s209 = scalar_select %p208, %s22, 1
        %s210 = smul.addr %s207, 2
        %s211 = sadd.s32 %s209, %s210
        %s212 = scalar_lea.vmem %s1, %s211
        %p213 = pneg %p80
        %p214 = pneg %p77
        %p215 = pneg %p101
        %p216 = pneg %p98
        %p217 = pneg %p129
        %p218 = pneg %p126
        %p219 = scmp.lt.s32.totalorder %s21, 1
        %s220 = scalar_select %p219, %s21, 1
        %p221 = scmp.lt.s32.totalorder %s22, 1
        %s222 = scalar_select %p221, %s22, 1
        %s223 = smul.addr %s220, 2
        %s224 = sadd.s32 %s222, %s223
        %s225 = scalar_lea.vmem %s3, %s224
        %p226 = scmp.lt.s32.totalorder %s21, 1
        %s227 = scalar_select %p226, %s21, 1
        %p228 = scmp.lt.s32.totalorder %s22, 1
        %s229 = scalar_select %p228, %s22, 1
        %s230 = smul.addr %s227, 2
        %s231 = sadd.s32 %s229, %s230
        %s232 = scalar_lea.vmem %s1, %s231
        %p233 = scmp.lt.s32.totalorder %s21, 1
        %s234 = scalar_select %p233, %s21, 1
        %p235 = scmp.lt.s32.totalorder %s22, 1
        %s236 = scalar_select %p235, %s22, 1
        %s237 = smul.addr %s234, 2
        %s238 = sadd.s32 %s236, %s237
        %s239 = scalar_lea.vmem %s3, %s238
        %v240 = vld [vmem:[%s193] sm:$0xf]
        %v241 = vld [vmem:[%s232] sm:$0x1]
        %v242 = vld [vmem:[%s2] sm:$0xf]
        %v243 = vlaneseq
        %v244 = vand.u32 %v243, 127
        %s245 = smul.u32 %s22, 128
        %v246 = vstv %s245
        %v247 = vadd.s32 %v246, %v244
        %vm248 = vcmp.lt.s32.totalorder %v247, 256
        %vm249 = vcmask 1043456
        %v250 = vsel %vm249, %v240, -inf
        %v251 = vrot.slane %v250, 4
        %v252 = vmax.f32 %v250, %v251
        %v253 = vrot.slane %v252, 2
        %v254 = vmax.f32 %v252, %v253
        %v255 = vrot.slane %v254, 1
        %v256 = vmax.f32 %v254, %v255
        %v257 = vsub.f32 %v240, %v256
        %v258 = vmul.f32 %v257, 1.442695
        %v259 = vpow.pop %v258
        %v260 = vsel %vm249, %v259, 0.0
        %v261 = vrot.slane %v260, 4
        %v262 = vadd.f32 %v260, %v261
        %v263 = vrot.slane %v262, 2
        %v264 = vadd.f32 %v262, %v263
        %v265 = vrot.slane %v264, 1
        %v266 = vadd.f32 %v264, %v265
        %v267 = vlog2.pop %v266
        %v268 = vmul.f32 %v267, 0.6931472
        %v269 = vlaneseq
        %v270 = vshrl.u32 %v269, 7
        %v271 = vperm.slane %v241, 0
        %vm272 = vcmp.eq.s32.totalorder %v270, %v271
        %v273 = vsel %vm272, %v257, 0.0
        %v274 = vsel %vm249, %v273, 0.0
        %v275 = vrot.slane %v274, 4
        %v276 = vadd.f32 %v274, %v275
        %v277 = vrot.slane %v276, 2
        %v278 = vadd.f32 %v276, %v277
        %v279 = vrot.slane %v278, 1
        %v280 = vadd.f32 %v278, %v279
        %282 = vset.pattern.permute.xlu0 0
        %283 = vperm.xlu0 %282, %v242
        %v284 = vpop.permute.xlu0 %283
        %v286 = vsel %vm272, %v284, 0.0
        %v287 = vsel %vm249, %v286, 0.0
        %v288 = vrot.slane %v287, 4
        %v289 = vadd.f32 %v287, %v288
        %v290 = vrot.slane %v289, 2
        %v291 = vadd.f32 %v289, %v290
        %v292 = vrot.slane %v291, 1
        %v293 = vadd.f32 %v291, %v292
        %v294 = vsub.f32 %v280, %v268
        %v295 = vmul.f32 %v294, 1.442695
        %v296 = vpow.pop %v295
        %v297 = vsub.f32 1.0, %v296
        %v298 = vmul.f32 %v297, %v297
        %v299 = vmul.f32 %v293, %v294
        %v300 = vmul.f32 %v298, %v299
        %v301 = vsub.f32 0.0, %v300
        %v302 = vsel %vm248, %v301, 0.0
        %vm303 = vcmask 1040384
        %v304 = vsel %vm303, %v302, 0.0
        %305 = vadd.xlane.f32.xlu0 %v304
        %v306 = vpop.xlane.xlu0 %305
        %v307 = vrot.slane %v306, 4
        %v308 = vadd.f32 %v306, %v307
        %v309 = vrot.slane %v308, 2
        %v310 = vadd.f32 %v308, %v309
        %v311 = vrot.slane %v310, 1
        %v312 = vadd.f32 %v310, %v311
        %s313 = vtos %v312
        %v314 = vstv %s313
        %vm315 = vcmask 0
        %316 = vst.msk [vmem:[%s239] sm:$0x1] %vm315, %v314
        %p317 = scmp.lt.s32.totalorder %s21, 1
        %s318 = scalar_select %p317, %s21, 1
        %p319 = scmp.lt.s32.totalorder %s22, 1
        %s320 = scalar_select %p319, %s22, 1
        %s321 = smul.addr %s318, 2
        %s322 = sadd.s32 %s320, %s321
        %s323 = scalar_lea.vmem %s3, %s322
        // Predicated region
        $region37: #{tpu_custom_call.1} parent=31 // pred_check
          %p324 = pneg %p126
        $region38: #{tpu_custom_call.1} parent=31 // pred_check_branch
          %326 = sbr.rel (%p324) target = $region40
        $region39: #{tpu_custom_call.1} parent=31 // pred_region
          _
        $region40: #{tpu_custom_call.1} parent=31 // pred_fallthru
          _
      $region32: #{tpu_custom_call.1} parent=5 // pred_fallthru
        _
      %p327 = scmp.le.s32.totalorder 2, %s12
      // Predicated region
      $region41: #{tpu_custom_call.1} parent=5 // pred_check
        %p328 = pneg %p327
      $region42: #{tpu_custom_call.1} parent=5 // pred_check_branch
        %330 = sbr.rel (%p328) target = $region44
      $region43: #{tpu_custom_call.1} parent=5 // pred_region
        %s331 = ssub.s32 %s12, 2
        // Predicated region
        $region45: #{tpu_custom_call.1} parent=43 // pred_check
          %p332 = pneg %p132
        $region46: #{tpu_custom_call.1} parent=43 // pred_check_branch
          %334 = sbr.rel (%p332) target = $region48
        $region47: #{tpu_custom_call.1} parent=43 // pred_region
          %p335 = scmp.lt.s32.totalorder %s23, 1
          %s336 = scalar_select %p335, %s23, 1
          %p337 = scmp.lt.s32.totalorder %s24, 1
          %s338 = scalar_select %p337, %s24, 1
          %s339 = smul.addr %s336, 2
          %s340 = sadd.s32 %s338, %s339
          %s341 = scalar_lea.vmem %s3, %s340
        $region48: #{tpu_custom_call.1} parent=43 // pred_fallthru
          _
      $region44: #{tpu_custom_call.1} parent=5 // pred_fallthru
        _
    $region6: #{tpu_custom_call.1} parent=1 // loop_footer
      %s16 = sadd.s32 1, %s12
    $region7: #{tpu_custom_call.1} parent=1 // loop_footer_branch
      %11 = sbr.rel target = $region3
    $region8: #{tpu_custom_call.1} parent=1 // loop_exit
      _
    %342 = vsyncpa [#allocation3], 1
    %s343 = scalar_lea.sflag [#allocation3], 1
    %344 = vsyncpa %s343, 1

</llo_original>
